<compile_context>
chip_gen: v6e
topology: v6e:2x2x1
jax: 0.10.0
libtpu: 0.0.40
codegen_flags: <defaults>
</compile_context>

<pallas_src>
import math
import functools

import jax
import jax.numpy as jnp
from jax import lax
from jax.experimental import pallas as pl
from jax.experimental.pallas import tpu as pltpu


def _build_pe(d_model: int, max_len: int) -> jnp.ndarray:
    """Same construction as the PyTorch __init__ (buffer 'pe')."""
    assert d_model % 2 == 0, "interleaved sin/cos table assumes even d_model"
    position = jnp.arange(max_len, dtype=jnp.float32)[:, None]            # [max_len, 1]
    div_term = jnp.exp(
        jnp.arange(0, d_model, 2, dtype=jnp.float32) * (-math.log(10000.0) / d_model)
    )                                                                     # [d_model//2]
    pe = jnp.zeros((max_len, d_model), dtype=jnp.float32)
    pe = pe.at[:, 0::2].set(jnp.sin(position * div_term))
    pe = pe.at[:, 1::2].set(jnp.cos(position * div_term))
    return pe


def _hash_u32(x):
    """'lowbias32' finalizer — a few integer VPU ops, free under the HBM-bound
    regime, lowers on Mosaic and under interpret mode (no TPU PRNG primitives)."""
    x = x ^ (x >> 16)
    x = x * jnp.uint32(0x7FEB352D)
    x = x ^ (x >> 15)
    x = x * jnp.uint32(0x846CA68B)
    x = x ^ (x >> 16)
    return x


def _pe_dropout_kernel(seed_ref, x_ref, pe_ref, o_ref, *,
                       seq_len, tile_s, d_model, drop_prob, apply_dropout):
    # x_ref block: (1, TS, D)   pe_ref block: (TS, D)   o_ref block: (1, TS, D)
    y = x_ref[...].astype(jnp.float32) + pe_ref[...].astype(jnp.float32)

    if apply_dropout:
        s_idx = pl.program_id(0)          # sequence-tile index
        b_idx = pl.program_id(1)          # batch index
        # Global element id -> mask is unique per element regardless of tiling,
        # so re-tiling never repeats a dropout mask across tiles.
        base_row = b_idx * seq_len + s_idx * tile_s
        shape = y.shape                                          # (1, TS, D)
        row = lax.broadcasted_iota(jnp.int32, shape, 1) + base_row
        col = lax.broadcasted_iota(jnp.int32, shape, 2)
        gid = row.astype(jnp.uint32) * jnp.uint32(d_model) + col.astype(jnp.uint32)
        seed_u = seed_ref[0].astype(jnp.uint32)
        h = _hash_u32(gid ^ (seed_u * jnp.uint32(0x9E3779B9)))
        # Integer threshold compare (bits >= p * 2^32) — no float uniform build.
        threshold = jnp.uint32(min(int(round(drop_prob * 2.0 ** 32)), 2 ** 32 - 1))
        keep = h >= threshold
        scale = jnp.float32(1.0 / (1.0 - drop_prob))
        y = jnp.where(keep, y * scale, jnp.float32(0.0))

    o_ref[...] = y.astype(o_ref.dtype)


def _pick_tile_s(S, D, itemsize, target_bytes=2 << 20):
    """Largest multiple-of-8 divisor of S whose (TS, D) tile is ~<= 2 MiB.
    Falls back to the full sequence if no aligned divisor exists."""
    max_rows = max(1, target_bytes // max(1, D * itemsize))
    if S <= max_rows:
        return S
    best = None
    ts = 8
    while ts <= max_rows:
        if S % ts == 0:
            best = ts
        ts += 8
    return best if best is not None else S


def positional_encoding_forward(x, pe, *, drop_prob=0.1, training=True, seed=0):
    """x: [B, S, D], pe: [max_len, D] (full buffer; rows selected by index_map)."""
    B, S, D = x.shape
    max_len, d_pe = pe.shape
    assert max_len >= S and d_pe == D

    tile_s = _pick_tile_s(S, D, x.dtype.itemsize)
    num_s = S // tile_s

    kernel = functools.partial(
        _pe_dropout_kernel,
        seq_len=S,
        tile_s=tile_s,
        d_model=D,
        drop_prob=float(drop_prob),
        apply_dropout=bool(training) and float(drop_prob) > 0.0,
    )

    grid_spec = pltpu.PrefetchScalarGridSpec(
        num_scalar_prefetch=1,                 # seed lands in SMEM
        grid=(num_s, B),                       # pe block index depends only on axis 0
        in_specs=[
            pl.BlockSpec((1, tile_s, D), lambda s, b, seed_ref: (b, s, 0)),   # x
            pl.BlockSpec((tile_s, D), lambda s, b, seed_ref: (s, 0)),         # full pe
        ],
        out_specs=pl.BlockSpec((1, tile_s, D), lambda s, b, seed_ref: (b, s, 0)),
    )

    return pl.pallas_call(
        kernel,
        out_shape=jax.ShapeDtypeStruct((B, S, D), x.dtype),
        grid_spec=grid_spec,
        compiler_params=pltpu.CompilerParams(
            dimension_semantics=("parallel", "parallel"),
        ),
    )(jnp.asarray([seed], dtype=jnp.int32), x, pe)


if __name__ == "__main__":
    B, S, D = 2, 8, 32
    MAX_LEN = 64
    DROP_P = 0.1

    key = jax.random.PRNGKey(0)
    x = jax.random.normal(key, (B, S, D), dtype=jnp.float32)
    pe = _build_pe(D, MAX_LEN)

    # Eval-mode pass (dropout disabled) — check exactly against x + pe[:S].
    out_eval = positional_encoding_forward(x, pe, drop_prob=DROP_P, training=False)
    out_eval = jax.block_until_ready(out_eval)
    ref_eval = x + pe[:S, :][None, :, :]
    assert jnp.allclose(out_eval, ref_eval, atol=1e-6), "eval-mode mismatch"

    # Training-mode pass (in-kernel dropout via integer hash PRNG).
    out_train = positional_encoding_forward(
        x, pe, drop_prob=DROP_P, training=True, seed=0
    )
    out_train = jax.block_until_ready(out_train)
    assert out_train.shape == (B, S, D)
    # Surviving elements are exactly (x+pe)/(1-p); dropped ones are 0.
    scaled_ref = ref_eval / (1.0 - DROP_P)
    ok = jnp.logical_or(
        jnp.isclose(out_train, scaled_ref, atol=1e-5), out_train == 0.0
    )
    assert bool(jnp.all(ok)), "training-mode dropout values inconsistent"
    assert bool(jnp.any(out_train == 0.0)), "dropout appears inactive"

    print("KERNEL_OK")
</pallas_src>

<mosaic_0001>
module attributes {stable_mosaic.version = 11 : i64} {
  func.func @_pe_dropout_kernel(%arg0: i32, %arg1: i32, %arg2: memref<1xi32, #tpu.memory_space<smem>>, %arg3: memref<1x8x32xf32, #tpu.memory_space<vmem>>, %arg4: memref<8x32xf32, #tpu.memory_space<vmem>>, %arg5: memref<1x8x32xf32, #tpu.memory_space<vmem>>) attributes {dimension_semantics = [#tpu.dimension_semantics<parallel>, #tpu.dimension_semantics<parallel>], iteration_bounds = array<i64: 1, 2>, scalar_prefetch = 1 : i64, scratch_operands = 0 : i64, tpu.core_type = #tpu.core_type<tc>, window_params = [{transform_indices = @transform_0, window_bounds = array<i64: 1, 8, 32>}, {transform_indices = @transform_1, window_bounds = array<i64: 8, 32>}, {transform_indices = @transform_2, window_bounds = array<i64: 1, 8, 32>}]} {
    %c0 = arith.constant 0 : index
    %c0_0 = arith.constant 0 : index
    %c0_1 = arith.constant 0 : index
    %0 = vector.load %arg3[%c0, %c0_0, %c0_1] : memref<1x8x32xf32, #tpu.memory_space<vmem>>, vector<1x8x32xf32>
    %c0_2 = arith.constant 0 : index
    %c0_3 = arith.constant 0 : index
    %1 = vector.load %arg4[%c0_2, %c0_3] : memref<8x32xf32, #tpu.memory_space<vmem>>, vector<8x32xf32>
    %2 = vector.shape_cast %1 : vector<8x32xf32> to vector<1x8x32xf32>
    %3 = arith.addf %0, %2 : vector<1x8x32xf32>
    %c0_4 = arith.constant 0 : index
    %c0_5 = arith.constant 0 : index
    %c0_6 = arith.constant 0 : index
    %4 = vector.load %arg5[%c0_4, %c0_5, %c0_6] : memref<1x8x32xf32, #tpu.memory_space<vmem>>, vector<1x8x32xf32>
    tpu.vector_store %arg5[%c0_4, %c0_5, %c0_6], %3 {strides = array<i32>} : memref<1x8x32xf32, #tpu.memory_space<vmem>>, vector<1x8x32xf32>,
    return
  }
  func.func @transform_0(%arg0: i32, %arg1: i32, %arg2: memref<1xi32, #tpu.memory_space<smem>>) -> (i32, i32, i32) {
    %c0_i32 = arith.constant 0 : i32
    %c0_i32_0 = arith.constant 0 : i32
    return %arg1, %arg0, %c0_i32 : i32, i32, i32
  }
  func.func @transform_1(%arg0: i32, %arg1: i32, %arg2: memref<1xi32, #tpu.memory_space<smem>>) -> (i32, i32) {
    %c0_i32 = arith.constant 0 : i32
    %c0_i32_0 = arith.constant 0 : i32
    return %arg0, %c0_i32 : i32, i32
  }
  func.func @transform_2(%arg0: i32, %arg1: i32, %arg2: memref<1xi32, #tpu.memory_space<smem>>) -> (i32, i32, i32) {
    %c0_i32 = arith.constant 0 : i32
    %c0_i32_0 = arith.constant 0 : i32
    return %arg1, %arg0, %c0_i32 : i32, i32, i32
  }
}

</mosaic_0001>

<llo_original>
// kernel: tpu_custom_call.1
$region0: #{tpu_custom_call.1}
  #allocation0 [shape = 'u32[]', space=smem, size = 0x4, offset = 0x4, fixed_abs, tag = 'smem constant byte address 0x4 - core index']
  #allocation1 [shape = 'u32[144,128]{1,0:T(1,128)}', space=vmem, size = 0x12000, scoped, tag = 'internal scratch']
  #allocation2 [shape = 's32[1]{0}', space=sflag, size = 0x4, scoped, tag = 'scoped memory for tpu_custom_call.1']
  #allocation3 [shape = 's32[1]{0:T(128)S(6)}', space=smem, size = 0x200, scoped, tag = 'prefetched SMEM operand 0']
  %s0 = inlined_call_operand.<no memory space> [shape: s32[1], index: 0, kind: input, shape index: {}]
  %s1 = inlined_call_operand.vmem [shape: f32[2,8,32], index: 1, kind: input, shape index: {}]
  %s2 = inlined_call_operand.vmem [shape: f32[64,32], index: 2, kind: input, shape index: {}]
  %s3 = inlined_call_operand.hbm [shape: f32[2,8,32], index: 3, kind: output, shape index: {}]
  %s4 = sld [smem:[#allocation0]]
  $region41: #{tpu_custom_call.1} parent=0
    _
  %s6 = ssub.s32 1, %s4
  %s7 = scalar_select 0, %s6, %s4
  %8 = sst [smem:[#allocation3]] %s0
  $region1: #{tpu_custom_call.1} parent=0
    #allocation4 [shape = 'u8[8192]{0}', space=vmem, size = 0x2000, scoped, tag = 'output window, operand 0']
    #allocation5 [shape = 's32[2]{0}', space=sflag, size = 0x8, scoped, tag = 'scoped memory for tpu_custom_call.1']
    %9 = vsyncpa [#allocation5], 0
    %s10 = scalar_lea.sflag [#allocation5], 1
    %11 = vsyncpa %s10, 0
    loop: start=0, step=1, limit=4
    $region2: #{tpu_custom_call.1} parent=1 // loop_pre_header
      _
    $region3: #{tpu_custom_call.1} parent=1 // loop_header
      %s13 = sphi 0, %s17
      %p14 = scmp.ge.s32.totalorder %s13, 4
      %s20 = sphi 0, %s32
      %s21 = sphi 0, %s28
      %s22 = sphi 0, %s20
      %s23 = sphi 0, %s21
      %s24 = sphi 0, %s22
      %s25 = sphi 0, %s23
      %s37 = sphi 0, %s39
      %s40 = sphi 0, %s37
      %s41 = sphi 0, %s40
      %s57 = sphi 0, %s41
      %s63 = sphi 0, %s65
      %s66 = sphi 0, %s63
      %s67 = sphi 0, %s66
      %s83 = sphi 0, %s67
      %s91 = sphi 0, %s93
      %s94 = sphi 0, %s91
      %s95 = sphi 0, %s94
      %s111 = sphi 0, %s95
    $region4: #{tpu_custom_call.1} parent=1 // loop_header_branch
      %16 = sbr.rel (%p14) target = $region8
    $region5: #{tpu_custom_call.1} parent=1 // loop_body
      %s18 = ssub.s32 %s13, 1
      %s19 = ssub.s32 %s13, 2
      %s26 = sadd.s32 1, %s21
      %p27 = scmp.ge.s32.totalorder %s26, 2
      %s28 = scalar_select %p27, 0, %s26
      %s29 = sadd.s32 1, %s20
      %s30 = scalar_select %p27, %s29, %s20
      %p31 = scmp.ge.s32.totalorder %s30, 1
      %s32 = scalar_select %p31, 0, %s30
      %s33 = ssub.s32 %s21, %s28
      %s34 = ssub.s32 %s20, %s32
      %s35 = sor.u32 %s33, %s34
      %p36 = scmp.eq.s32.totalorder %s35, 0
      %s38 = sadd.s32 %s37, 1
      %s39 = scalar_select %p36, %s37, %s38
      %p42 = pneg %p36
      %p43 = scmp.eq.s32.totalorder %s13, 1
      %p44 = por %p42, %p43
      %p45 = scmp.ne.s32.totalorder %s37, %s40
      %p46 = scmp.eq.s32.totalorder %s13, 0
      %p47 = por %p45, %p46
      %p48 = scmp.ne.s32.totalorder %s37, %s40
      %p49 = scmp.eq.s32.totalorder %s18, 1
      %p50 = por %p48, %p49
      %p51 = scmp.ne.s32.totalorder %s40, %s41
      %p52 = scmp.eq.s32.totalorder %s18, 0
      %p53 = por %p51, %p52
      %p54 = scmp.ne.s32.totalorder %s40, %s41
      %p55 = scmp.eq.s32.totalorder %s19, 1
      %p56 = por %p54, %p55
      %p58 = scmp.ne.s32.totalorder %s41, %s57
      %p59 = scmp.eq.s32.totalorder %s19, 0
      %p60 = por %p58, %p59
      %s61 = ssub.s32 %s20, %s32
      %p62 = scmp.eq.s32.totalorder %s61, 0
      %s64 = sadd.s32 %s63, 1
      %s65 = scalar_select %p62, %s63, %s64
      %p68 = pneg %p62
      %p69 = scmp.eq.s32.totalorder %s13, 1
      %p70 = por %p68, %p69
      %p71 = scmp.ne.s32.totalorder %s63, %s66
      %p72 = scmp.eq.s32.totalorder %s13, 0
      %p73 = por %p71, %p72
      %p74 = scmp.ne.s32.totalorder %s63, %s66
      %p75 = scmp.eq.s32.totalorder %s18, 1
      %p76 = por %p74, %p75
      %p77 = scmp.ne.s32.totalorder %s66, %s67
      %p78 = scmp.eq.s32.totalorder %s18, 0
      %p79 = por %p77, %p78
      %p80 = scmp.ne.s32.totalorder %s66, %s67
      %p81 = scmp.eq.s32.totalorder %s19, 1
      %p82 = por %p80, %p81
      %p84 = scmp.ne.s32.totalorder %s67, %s83
      %p85 = scmp.eq.s32.totalorder %s19, 0
      %p86 = por %p84, %p85
      %s87 = ssub.s32 %s21, %s28
      %s88 = ssub.s32 %s20, %s32
      %s89 = sor.u32 %s87, %s88
      %p90 = scmp.eq.s32.totalorder %s89, 0
      %s92 = sadd.s32 %s91, 1
      %s93 = scalar_select %p90, %s91, %s92
      %p96 = pneg %p90
      %p97 = scmp.eq.s32.totalorder %s13, 1
      %p98 = por %p96, %p97
      %p99 = scmp.ne.s32.totalorder %s91, %s94
      %p100 = scmp.eq.s32.totalorder %s13, 0
      %p101 = por %p99, %p100
      %p102 = scmp.ne.s32.totalorder %s91, %s94
      %p103 = scmp.eq.s32.totalorder %s18, 1
      %p104 = por %p102, %p103
      %p105 = scmp.ne.s32.totalorder %s94, %s95
      %p106 = scmp.eq.s32.totalorder %s18, 0
      %p107 = por %p105, %p106
      %p108 = scmp.ne.s32.totalorder %s94, %s95
      %p109 = scmp.eq.s32.totalorder %s19, 1
      %p110 = por %p108, %p109
      %p112 = scmp.ne.s32.totalorder %s95, %s111
      %p113 = scmp.eq.s32.totalorder %s19, 0
      %p114 = por %p112, %p113
      %p115 = scmp.le.s32.totalorder 1, %s13
      %p116 = scmp.lt.s32.totalorder %s13, 3
      %p117 = pnand %p115, %p116
      %p118 = pneg %p117
      // Predicated region
      $region9: #{tpu_custom_call.1} parent=5 // pred_check
        _
      $region10: #{tpu_custom_call.1} parent=5 // pred_check_branch
        %120 = sbr.rel (%p117) target = $region12
      $region11: #{tpu_custom_call.1} parent=5 // pred_region
        %s121 = ssub.s32 %s13, 1
        // Predicated region
        $region13: #{tpu_custom_call.1} parent=11 // pred_check
          %p122 = pneg %p79
        $region14: #{tpu_custom_call.1} parent=11 // pred_check_branch
          %124 = sbr.rel (%p122) target = $region16
        $region15: #{tpu_custom_call.1} parent=11 // pred_region
          %p125 = scmp.lt.s32.totalorder %s22, 7
          %s126 = scalar_select %p125, %s22, 7
          %s127 = smul.addr %s126, 8
          %s128 = scalar_lea.vmem %s2, %s127
        $region16: #{tpu_custom_call.1} parent=11 // pred_fallthru
          _
      $region12: #{tpu_custom_call.1} parent=5 // pred_fallthru
        _
      %p129 = scmp.lt.s32.totalorder %s13, 2
      // Predicated region
      $region17: #{tpu_custom_call.1} parent=5 // pred_check
        %p130 = pneg %p129
      $region18: #{tpu_custom_call.1} parent=5 // pred_check_branch
        %132 = sbr.rel (%p130) target = $region20
      $region19: #{tpu_custom_call.1} parent=5 // pred_region
        // Predicated region
        $region21: #{tpu_custom_call.1} parent=19 // pred_check
          %p133 = pneg %p47
        $region22: #{tpu_custom_call.1} parent=19 // pred_check_branch
          %135 = sbr.rel (%p133) target = $region24
        $region23: #{tpu_custom_call.1} parent=19 // pred_region
          %p136 = scmp.lt.s32.totalorder %s21, 1
          %s137 = scalar_select %p136, %s21, 1
          %p138 = scmp.lt.s32.totalorder %s20, 0
          %s139 = scalar_select %p138, %s20, 0
          %s140 = sadd.s32 %s139, %s137
          %s141 = smul.addr %s140, 8
          %s142 = scalar_lea.vmem %s1, %s141
        $region24: #{tpu_custom_call.1} parent=19 // pred_fallthru
          _
      $region20: #{tpu_custom_call.1} parent=5 // pred_fallthru
        _
      %p143 = scmp.le.s32.totalorder 1, %s13
      %p144 = scmp.lt.s32.totalorder %s13, 3
      %p145 = pnand %p143, %p144
      %p146 = pneg %p145
      // Predicated region
      $region25: #{tpu_custom_call.1} parent=5 // pred_check
        _
      $region26: #{tpu_custom_call.1} parent=5 // pred_check_branch
        %148 = sbr.rel (%p145) target = $region28
      $region27: #{tpu_custom_call.1} parent=5 // pred_region
        %s149 = ssub.s32 %s13, 1
        %p150 = scmp.lt.s32.totalorder %s23, 1
        %s151 = scalar_select %p150, %s23, 1
        %p152 = scmp.lt.s32.totalorder %s22, 0
        %s153 = scalar_select %p152, %s22, 0
        %s154 = sadd.s32 %s153, %s151
        %s155 = smul.addr %s154, 8
        %s156 = scalar_lea.vmem %s1, %s155
        %p157 = pneg %p53
        %p158 = pneg %p50
        %p159 = scmp.lt.s32.totalorder %s22, 7
        %s160 = scalar_select %p159, %s22, 7
        %s161 = smul.addr %s160, 8
        %s162 = scalar_lea.vmem %s2, %s161
        %p163 = pneg %p79
        %p164 = pneg %p76
        %p165 = pneg %p107
        %p166 = pneg %p104
        %s167 = sand.u32 %s94, 1
        %s168 = scalar_lea.sflag [#allocation5], %s167
        %s169 = sand.u32 %s94, 1
        %s170 = smul.addr %s169, 8
        %s171 = scalar_lea.vmem [#allocation4], %s170
        %p172 = scmp.lt.s32.totalorder %s23, 1
        %s173 = scalar_select %p172, %s23, 1
        %p174 = scmp.lt.s32.totalorder %s22, 0
        %s175 = scalar_select %p174, %s22, 0
        %s176 = sadd.s32 %s175, %s173
        %s177 = smul.addr %s176, 8
        %s178 = scalar_lea.vmem %s1, %s177
        %p179 = scmp.lt.s32.totalorder %s22, 7
        %s180 = scalar_select %p179, %s22, 7
        %s181 = smul.addr %s180, 8
        %s182 = scalar_lea.vmem %s2, %s181
        %v183 = vld [vmem:[%s178] sm:$0xff]
        %v184 = vld [vmem:[%s182] sm:$0xff]
        %v185 = vadd.f32 %v183, %v184
        %vm186 = vcmask 261120
        %187 = vst.msk [vmem:[%s171] sm:$0xff] %vm186, %v185
        %s188 = sand.u32 %s94, 1
        %s189 = scalar_lea.sflag [#allocation5], %s188
        %s190 = sand.u32 %s94, 1
        %s191 = smul.addr %s190, 8
        %s192 = scalar_lea.vmem [#allocation4], %s191
        // Predicated region
        $region29: #{tpu_custom_call.1} parent=27 // pred_check
          %p193 = pneg %p104
        $region30: #{tpu_custom_call.1} parent=27 // pred_check_branch
          %195 = sbr.rel (%p193) target = $region32
        $region31: #{tpu_custom_call.1} parent=27 // pred_region
          %s197 = ssub.s32 128, 128
          %198 = vsyncadd %s189, %s197
          %s199 = sadd.s32 %s22, %s23
          %s200 = smul.addr %s199, 128
          %s201 = scalar_lea.hbm %s3, %s200
          %s203 = sshll.u32 %s192, 4
          %s204 = int_to_ptr.vmem [resolvable:$true] %s203
          %206 = dma.vmem_to_hbm [thread:$0]  %s204, 128, %s201, %s189
        $region32: #{tpu_custom_call.1} parent=27 // pred_fallthru
          _
      $region28: #{tpu_custom_call.1} parent=5 // pred_fallthru
        _
      %p207 = scmp.le.s32.totalorder 2, %s13
      // Predicated region
      $region33: #{tpu_custom_call.1} parent=5 // pred_check
        %p208 = pneg %p207
      $region34: #{tpu_custom_call.1} parent=5 // pred_check_branch
        %210 = sbr.rel (%p208) target = $region36
      $region35: #{tpu_custom_call.1} parent=5 // pred_region
        %s211 = ssub.s32 %s13, 2
        // Predicated region
        $region37: #{tpu_custom_call.1} parent=35 // pred_check
          %p212 = pneg %p110
        $region38: #{tpu_custom_call.1} parent=35 // pred_check_branch
          %214 = sbr.rel (%p212) target = $region40
        $region39: #{tpu_custom_call.1} parent=35 // pred_region
          %s215 = sand.u32 %s95, 1
          %s216 = scalar_lea.sflag [#allocation5], %s215
          %s217 = sand.u32 %s95, 1
          %s218 = smul.addr %s217, 8
          %s219 = scalar_lea.vmem [#allocation4], %s218
          %220 = dma.done %s216, 128
        $region40: #{tpu_custom_call.1} parent=35 // pred_fallthru
          _
      $region36: #{tpu_custom_call.1} parent=5 // pred_fallthru
        _
    $region6: #{tpu_custom_call.1} parent=1 // loop_footer
      %s17 = sadd.s32 1, %s13
    $region7: #{tpu_custom_call.1} parent=1 // loop_footer_branch
      %12 = sbr.rel target = $region3
    $region8: #{tpu_custom_call.1} parent=1 // loop_exit
      _
    %221 = vsyncpa [#allocation5], 1
    %s222 = scalar_lea.sflag [#allocation5], 1
    %223 = vsyncpa %s222, 1

</llo_original>
